<compile_context>
chip_gen: v6e
topology: v6e:2x2x1
jax: 0.10.0
libtpu: 0.0.40
codegen_flags: <defaults>
</compile_context>

<pallas_src>
import functools

import numpy as np
import jax
import jax.numpy as jnp
from jax.experimental import pallas as pl
from jax.experimental.pallas import tpu as pltpu

MAX_N_OBJECTS = 25          # module default max_n_objects
SEM_CLASS = 2               # module default sem_class
NUM_LABEL_VALUES = 8        # static bound: label values live in [0, NUM_LABEL_VALUES)


# ---------------------------------------------------------------------------
# Pass 1: per-image presence table (tiled OR-reduction over the pixel axis).
# ---------------------------------------------------------------------------
def _presence_kernel(lbl_ref, pres_ref, *, num_values):
    # lbl_ref : (1, 1, T)          int32 pixel tile of the current image
    # pres_ref: (1, num_values, 1) int32 accumulator (resident across tiles)
    @pl.when(pl.program_id(1) == 0)
    def _():
        pres_ref[...] = jnp.zeros_like(pres_ref)

    lbl = lbl_ref[0]                                               # (1, T)
    t = lbl.shape[1]
    vals = jax.lax.broadcasted_iota(jnp.int32, (num_values, t), 0)
    hit = (lbl == vals).astype(jnp.int32)                          # (num_values, T)
    tile_pres = jnp.max(hit, axis=1, keepdims=True)                # (num_values, 1)
    pres_ref[0] = jnp.maximum(pres_ref[0], tile_pres)


# ---------------------------------------------------------------------------
# Pass 2: purely elementwise mask generation for one pixel tile.
# ---------------------------------------------------------------------------
def _mask_kernel(chan_ref, lbl_ref, inst_ref, sem_ref, *, sem_class):
    # chan_ref: (1, max_n_objects, 1) int32, label value of each instance
    #           channel for this image (-1 for unused channels).
    # lbl_ref : (1, 1, T) int32 pixel tile.
    lbl = lbl_ref[0]                                               # (1, T)
    chan_vals = chan_ref[0]                                        # (C, 1)

    # Every instance plane with a single broadcast compare + one bulk store.
    inst_ref[0] = (chan_vals == lbl).astype(jnp.int8)              # (C, T)

    # Semantic planes: row 0 = background, row 1 = foreground.
    fg = (lbl != 0).astype(jnp.int32)                              # (1, T)
    ch2 = jax.lax.broadcasted_iota(jnp.int32, (sem_class, lbl.shape[1]), 0)
    sem_ref[0] = (ch2 == fg).astype(jnp.int8)                      # (sem_class, T)


def _pick_pixel_tile(hw, max_tile=32 * 1024):
    """Largest halving divisor of hw that is 128-aligned and <= max_tile.

    Falls back to the full pixel extent (always a legal block shape).
    """
    if hw <= max_tile:
        return hw
    t = hw
    while t > max_tile and t % 2 == 0:
        t //= 2
    if t > max_tile or t % 128 != 0 or hw % t != 0:
        return hw
    return t


def discriminative_binary_mask(labels,
                               *,
                               max_n_objects=MAX_N_OBJECTS,
                               sem_class=SEM_CLASS,
                               num_values=NUM_LABEL_VALUES):
    """Pallas equivalent of Discriminative_binary_Mask.forward.

    Returns (instance_mask (B, max_n_objects, H, W) int8,
             sem_mask      (B, sem_class,     H, W) int8,
             n_object_list (B,) int32).
    """
    B, H, W = labels.shape
    HW = H * W
    labels_flat = labels.astype(jnp.int32).reshape(B, 1, HW)       # lane-dense layout

    T = _pick_pixel_tile(HW)
    n_tiles = HW // T

    # ---------------- pass 1: presence table ------------------------------
    presence = pl.pallas_call(
        functools.partial(_presence_kernel, num_values=num_values),
        out_shape=jax.ShapeDtypeStruct((B, num_values, 1), jnp.int32),
        grid_spec=pltpu.PrefetchScalarGridSpec(
            num_scalar_prefetch=0,
            grid=(B, n_tiles),
            in_specs=[pl.BlockSpec((1, 1, T), lambda b, t: (b, 0, t))],
            out_specs=pl.BlockSpec((1, num_values, 1), lambda b, t: (b, 0, 0)),
        ),
        compiler_params=pltpu.CompilerParams(
            dimension_semantics=("parallel", "arbitrary")),
    )(labels_flat)

    presence_2d = presence.reshape(B, num_values)                  # (B, V) 0/1

    # -------- tiny XLA glue: channel->value table + object counts ---------
    pres_nz = presence_2d[:, 1:]                                   # (B, V-1)
    nobj = jnp.sum(pres_nz, axis=1).astype(jnp.int32)              # (B,)
    ranks = jnp.cumsum(pres_nz, axis=1) - 1                        # (B, V-1)
    chan_ids = jnp.arange(max_n_objects, dtype=jnp.int32)
    onehot = (ranks[:, :, None] == chan_ids[None, None, :]) & (pres_nz[:, :, None] > 0)
    vals = jnp.arange(1, num_values, dtype=jnp.int32)
    chan_vals = jnp.sum(jnp.where(onehot, vals[None, :, None], 0), axis=1)
    chan_vals = jnp.where(jnp.any(onehot, axis=1), chan_vals, -1)  # (B, C); -1 = unused
    chan_vals = chan_vals.astype(jnp.int32).reshape(B, max_n_objects, 1)

    # ---------------- pass 2: mask generation (elementwise) ---------------
    inst_flat, sem_flat = pl.pallas_call(
        functools.partial(_mask_kernel, sem_class=sem_class),
        out_shape=(
            jax.ShapeDtypeStruct((B, max_n_objects, HW), jnp.int8),
            jax.ShapeDtypeStruct((B, sem_class, HW), jnp.int8),
        ),
        grid_spec=pltpu.PrefetchScalarGridSpec(
            num_scalar_prefetch=0,
            grid=(B, n_tiles),
            in_specs=[
                pl.BlockSpec((1, max_n_objects, 1), lambda b, t: (b, 0, 0)),
                pl.BlockSpec((1, 1, T), lambda b, t: (b, 0, t)),
            ],
            out_specs=(
                pl.BlockSpec((1, max_n_objects, T), lambda b, t: (b, 0, t)),
                pl.BlockSpec((1, sem_class, T), lambda b, t: (b, 0, t)),
            ),
        ),
        compiler_params=pltpu.CompilerParams(
            dimension_semantics=("parallel", "parallel")),
    )(chan_vals, labels_flat)

    instance_mask = inst_flat.reshape(B, max_n_objects, H, W)
    sem_mask = sem_flat.reshape(B, sem_class, H, W)
    return instance_mask, sem_mask, nobj


# ---------------------------------------------------------------------------
# Verification against a straight numpy port of the PyTorch forward.
# ---------------------------------------------------------------------------
def _reference_numpy(labels_np, max_n_objects=MAX_N_OBJECTS):
    B, H, W = labels_np.shape
    inst = np.zeros((B, max_n_objects, H, W), dtype=np.int64)
    sem = np.zeros((B, SEM_CLASS, H, W), dtype=np.int64)
    nobj = np.zeros((B,), dtype=np.int64)
    for i in range(B):
        lbl = labels_np[i]
        vals = sorted(set(np.unique(lbl)) - {0})
        nobj[i] = len(vals)
        for l, v in enumerate(vals):
            inst[i, l] = (lbl == v).astype(np.int64)
        fg = inst[i].sum(axis=0) != 0
        sem[i, 0] = (~fg).astype(np.int64)
        sem[i, 1] = fg.astype(np.int64)
    return inst, sem, nobj


if __name__ == "__main__":
    key = jax.random.PRNGKey(0)
    B, H, W = 2, 16, 16
    labels = jax.random.randint(key, (B, H, W), 0, NUM_LABEL_VALUES,
                                dtype=jnp.int32)

    masks_fn = jax.jit(discriminative_binary_mask)
    inst, sem, nobj = masks_fn(labels)
    jax.block_until_ready((inst, sem, nobj))

    ref_inst, ref_sem, ref_nobj = _reference_numpy(np.asarray(labels))
    assert np.array_equal(np.asarray(inst), ref_inst), "instance_mask mismatch"
    assert np.array_equal(np.asarray(sem), ref_sem), "sem_mask mismatch"
    assert np.array_equal(np.asarray(nobj), ref_nobj), "n_object_list mismatch"

    print("KERNEL_OK")
</pallas_src>

<mosaic_0001>
module attributes {stable_mosaic.version = 11 : i64} {
  func.func @_presence_kernel(%arg0: i32, %arg1: i32, %arg2: memref<1x1x256xi32, #tpu.memory_space<vmem>>, %arg3: memref<1x8x1xi32, #tpu.memory_space<vmem>>) attributes {dimension_semantics = [#tpu.dimension_semantics<parallel>, #tpu.dimension_semantics<arbitrary>], iteration_bounds = array<i64: 2, 1>, scalar_prefetch = 0 : i64, scratch_operands = 0 : i64, tpu.core_type = #tpu.core_type<tc>, window_params = [{transform_indices = @transform_0, window_bounds = array<i64: 1, 1, 256>}, {transform_indices = @transform_1, window_bounds = array<i64: 1, 8, 1>}]} {
    %c0_i32 = arith.constant 0 : i32
    %0 = arith.cmpi eq, %arg1, %c0_i32 : i32
    %1 = arith.extui %0 : i1 to i32
    %c0_i32_0 = arith.constant 0 : i32
    %2 = arith.cmpi ne, %1, %c0_i32_0 : i32
    scf.if %2 {
      %c0_i32_9 = arith.constant 0 : i32
      %17 = vector.broadcast %c0_i32_9 : i32 to vector<1x8x1xi32>
      %c0_10 = arith.constant 0 : index
      %c0_11 = arith.constant 0 : index
      %c0_12 = arith.constant 0 : index
      %18 = vector.load %arg3[%c0_10, %c0_11, %c0_12] : memref<1x8x1xi32, #tpu.memory_space<vmem>>, vector<1x8x1xi32>
      tpu.vector_store %arg3[%c0_10, %c0_11, %c0_12], %17 {strides = array<i32>} : memref<1x8x1xi32, #tpu.memory_space<vmem>>, vector<1x8x1xi32>,
    } else {
    }
    %c0 = arith.constant 0 : index
    %c0_1 = arith.constant 0 : index
    %c0_2 = arith.constant 0 : index
    %3 = vector.load %arg2[%c0, %c0_1, %c0_2] : memref<1x1x256xi32, #tpu.memory_space<vmem>>, vector<1x1x256xi32>
    %4 = vector.shape_cast %3 : vector<1x1x256xi32> to vector<1x256xi32>
    %5 = tpu.iota {dimensions = array<i32: 0>} : vector<8x256xi32>
    %6 = vector.broadcast %4 : vector<1x256xi32> to vector<8x256xi32>
    %7 = arith.cmpi eq, %6, %5 : vector<8x256xi32>
    %8 = arith.extui %7 : vector<8x256xi1> to vector<8x256xi32>
    %cst = arith.constant dense<-2147483648> : vector<8xi32>
    %9 = vector.multi_reduction <maxsi>, %8, %cst [1] : vector<8x256xi32> to vector<8xi32>
    %10 = vector.shape_cast %9 : vector<8xi32> to vector<8x1xi32>
    %c0_3 = arith.constant 0 : index
    %c0_4 = arith.constant 0 : index
    %c0_5 = arith.constant 0 : index
    %11 = vector.load %arg3[%c0_3, %c0_4, %c0_5] : memref<1x8x1xi32, #tpu.memory_space<vmem>>, vector<1x8x1xi32>
    %12 = vector.shape_cast %11 : vector<1x8x1xi32> to vector<8x1xi32>
    %13 = arith.maxsi %12, %10 : vector<8x1xi32>
    %c0_6 = arith.constant 0 : index
    %c0_7 = arith.constant 0 : index
    %c0_8 = arith.constant 0 : index
    %14 = vector.load %arg3[%c0_6, %c0_7, %c0_8] : memref<1x8x1xi32, #tpu.memory_space<vmem>>, vector<1x8x1xi32>
    %15 = vector.shape_cast %14 : vector<1x8x1xi32> to vector<8x1xi32>
    %16 = vector.shape_cast %13 : vector<8x1xi32> to vector<1x8x1xi32>
    tpu.vector_store %arg3[%c0_6, %c0_7, %c0_8], %16 {strides = array<i32>} : memref<1x8x1xi32, #tpu.memory_space<vmem>>, vector<1x8x1xi32>,
    return
  }
  func.func @transform_0(%arg0: i32, %arg1: i32) -> (i32, i32, i32) {
    %c0_i32 = arith.constant 0 : i32
    %c0_i32_0 = arith.constant 0 : i32
    return %arg0, %c0_i32, %arg1 : i32, i32, i32
  }
  func.func @transform_1(%arg0: i32, %arg1: i32) -> (i32, i32, i32) {
    %c0_i32 = arith.constant 0 : i32
    %c0_i32_0 = arith.constant 0 : i32
    %c0_i32_1 = arith.constant 0 : i32
    return %arg0, %c0_i32, %c0_i32_0 : i32, i32, i32
  }
}

module attributes {stable_mosaic.version = 11 : i64} {
  func.func @_mask_kernel(%arg0: i32, %arg1: i32, %arg2: memref<1x25x1xi32, #tpu.memory_space<vmem>>, %arg3: memref<1x1x256xi32, #tpu.memory_space<vmem>>, %arg4: memref<1x25x256xi8, #tpu.memory_space<vmem>>, %arg5: memref<1x2x256xi8, #tpu.memory_space<vmem>>) attributes {dimension_semantics = [#tpu.dimension_semantics<parallel>, #tpu.dimension_semantics<parallel>], iteration_bounds = array<i64: 2, 1>, scalar_prefetch = 0 : i64, scratch_operands = 0 : i64, tpu.core_type = #tpu.core_type<tc>, window_params = [{transform_indices = @transform_0, window_bounds = array<i64: 1, 25, 1>}, {transform_indices = @transform_1, window_bounds = array<i64: 1, 1, 256>}, {transform_indices = @transform_2, window_bounds = array<i64: 1, 25, 256>}, {transform_indices = @transform_3, window_bounds = array<i64: 1, 2, 256>}]} {
    %c0 = arith.constant 0 : index
    %c0_0 = arith.constant 0 : index
    %c0_1 = arith.constant 0 : index
    %0 = vector.load %arg3[%c0, %c0_0, %c0_1] : memref<1x1x256xi32, #tpu.memory_space<vmem>>, vector<1x1x256xi32>
    %1 = vector.shape_cast %0 : vector<1x1x256xi32> to vector<1x256xi32>
    %c0_2 = arith.constant 0 : index
    %c0_3 = arith.constant 0 : index
    %c0_4 = arith.constant 0 : index
    %2 = vector.load %arg2[%c0_2, %c0_3, %c0_4] : memref<1x25x1xi32, #tpu.memory_space<vmem>>, vector<1x25x1xi32>
    %3 = vector.shape_cast %2 : vector<1x25x1xi32> to vector<25x1xi32>
    %4 = vector.broadcast %3 : vector<25x1xi32> to vector<25x256xi32>
    %5 = vector.broadcast %1 : vector<1x256xi32> to vector<25x256xi32>
    %6 = arith.cmpi eq, %4, %5 : vector<25x256xi32>
    %7 = arith.extui %6 : vector<25x256xi1> to vector<25x256xi8>
    %c0_5 = arith.constant 0 : index
    %c0_6 = arith.constant 0 : index
    %c0_7 = arith.constant 0 : index
    %8 = vector.load %arg4[%c0_5, %c0_6, %c0_7] : memref<1x25x256xi8, #tpu.memory_space<vmem>>, vector<1x25x256xi8>
    %9 = vector.shape_cast %8 : vector<1x25x256xi8> to vector<25x256xi8>
    %10 = vector.shape_cast %7 : vector<25x256xi8> to vector<1x25x256xi8>
    tpu.vector_store %arg4[%c0_5, %c0_6, %c0_7], %10 {strides = array<i32>} : memref<1x25x256xi8, #tpu.memory_space<vmem>>, vector<1x25x256xi8>,
    %c0_i32 = arith.constant 0 : i32
    %11 = vector.broadcast %c0_i32 : i32 to vector<1x256xi32>
    %12 = arith.cmpi ne, %1, %11 : vector<1x256xi32>
    %13 = arith.extui %12 : vector<1x256xi1> to vector<1x256xi32>
    %14 = tpu.iota {dimensions = array<i32: 0>} : vector<2x256xi32>
    %15 = vector.broadcast %13 : vector<1x256xi32> to vector<2x256xi32>
    %16 = arith.cmpi eq, %14, %15 : vector<2x256xi32>
    %17 = arith.extui %16 : vector<2x256xi1> to vector<2x256xi8>
    %c0_8 = arith.constant 0 : index
    %c0_9 = arith.constant 0 : index
    %c0_10 = arith.constant 0 : index
    %18 = vector.load %arg5[%c0_8, %c0_9, %c0_10] : memref<1x2x256xi8, #tpu.memory_space<vmem>>, vector<1x2x256xi8>
    %19 = vector.shape_cast %18 : vector<1x2x256xi8> to vector<2x256xi8>
    %20 = vector.shape_cast %17 : vector<2x256xi8> to vector<1x2x256xi8>
    tpu.vector_store %arg5[%c0_8, %c0_9, %c0_10], %20 {strides = array<i32>} : memref<1x2x256xi8, #tpu.memory_space<vmem>>, vector<1x2x256xi8>,
    return
  }
  func.func @transform_0(%arg0: i32, %arg1: i32) -> (i32, i32, i32) {
    %c0_i32 = arith.constant 0 : i32
    %c0_i32_0 = arith.constant 0 : i32
    %c0_i32_1 = arith.constant 0 : i32
    return %arg0, %c0_i32, %c0_i32_0 : i32, i32, i32
  }
  func.func @transform_1(%arg0: i32, %arg1: i32) -> (i32, i32, i32) {
    %c0_i32 = arith.constant 0 : i32
    %c0_i32_0 = arith.constant 0 : i32
    return %arg0, %c0_i32, %arg1 : i32, i32, i32
  }
  func.func @transform_2(%arg0: i32, %arg1: i32) -> (i32, i32, i32) {
    %c0_i32 = arith.constant 0 : i32
    %c0_i32_0 = arith.constant 0 : i32
    return %arg0, %c0_i32, %arg1 : i32, i32, i32
  }
  func.func @transform_3(%arg0: i32, %arg1: i32) -> (i32, i32, i32) {
    %c0_i32 = arith.constant 0 : i32
    %c0_i32_0 = arith.constant 0 : i32
    return %arg0, %c0_i32, %arg1 : i32, i32, i32
  }
}

</mosaic_0001>

<llo_original>
// kernel: discriminative_binary_mask.2
$region0: #{discriminative_binary_mask.2}
  #allocation0 [shape = 'u32[]', space=smem, size = 0x4, offset = 0x4, fixed_abs, tag = 'smem constant byte address 0x4 - core index']
  #allocation1 [shape = 'u32[144,128]{1,0:T(1,128)}', space=vmem, size = 0x12000, scoped, tag = 'internal scratch']
  %s0 = inlined_call_operand.vmem [shape: s32[2,1,256], index: 0, kind: input, shape index: {}]
  %s1 = inlined_call_operand.vmem [shape: s32[2,8,1], index: 1, kind: output, shape index: {}]
  %s2 = sld [smem:[#allocation0]]
  $region41: #{discriminative_binary_mask.2} parent=0
    _
  %s4 = ssub.s32 1, %s2
  %s5 = scalar_select 0, %s4, %s2
  loop: start=0, step=1, limit=4
  $region2: #{discriminative_binary_mask.2} parent=0 // loop_pre_header
    _
  $region3: #{discriminative_binary_mask.2} parent=0 // loop_header
    %s7 = sphi 0, %s11
    %p8 = scmp.ge.s32.totalorder %s7, 4
    %s14 = sphi 0, %s26
    %s15 = sphi 0, %s22
    %s16 = sphi 0, %s14
    %s17 = sphi 0, %s15
    %s18 = sphi 0, %s16
    %s19 = sphi 0, %s17
    %s31 = sphi 0, %s33
    %s34 = sphi 0, %s31
    %s35 = sphi 0, %s34
    %s51 = sphi 0, %s35
    %s57 = sphi 0, %s59
    %s60 = sphi 0, %s57
    %s61 = sphi 0, %s60
    %s77 = sphi 0, %s61
  $region4: #{discriminative_binary_mask.2} parent=0 // loop_header_branch
    %10 = sbr.rel (%p8) target = $region8
  $region5: #{discriminative_binary_mask.2} parent=0 // loop_body
    %s12 = ssub.s32 %s7, 1
    %s13 = ssub.s32 %s7, 2
    %s20 = sadd.s32 1, %s15
    %p21 = scmp.ge.s32.totalorder %s20, 1
    %s22 = scalar_select %p21, 0, %s20
    %s23 = sadd.s32 1, %s14
    %s24 = scalar_select %p21, %s23, %s14
    %p25 = scmp.ge.s32.totalorder %s24, 2
    %s26 = scalar_select %p25, 0, %s24
    %s27 = ssub.s32 %s14, %s26
    %s28 = ssub.s32 %s15, %s22
    %s29 = sor.u32 %s27, %s28
    %p30 = scmp.eq.s32.totalorder %s29, 0
    %s32 = sadd.s32 %s31, 1
    %s33 = scalar_select %p30, %s31, %s32
    %p36 = pneg %p30
    %p37 = scmp.eq.s32.totalorder %s7, 1
    %p38 = por %p36, %p37
    %p39 = scmp.ne.s32.totalorder %s31, %s34
    %p40 = scmp.eq.s32.totalorder %s7, 0
    %p41 = por %p39, %p40
    %p42 = scmp.ne.s32.totalorder %s31, %s34
    %p43 = scmp.eq.s32.totalorder %s12, 1
    %p44 = por %p42, %p43
    %p45 = scmp.ne.s32.totalorder %s34, %s35
    %p46 = scmp.eq.s32.totalorder %s12, 0
    %p47 = por %p45, %p46
    %p48 = scmp.ne.s32.totalorder %s34, %s35
    %p49 = scmp.eq.s32.totalorder %s13, 1
    %p50 = por %p48, %p49
    %p52 = scmp.ne.s32.totalorder %s35, %s51
    %p53 = scmp.eq.s32.totalorder %s13, 0
    %p54 = por %p52, %p53
    %s55 = ssub.s32 %s14, %s26
    %p56 = scmp.eq.s32.totalorder %s55, 0
    %s58 = sadd.s32 %s57, 1
    %s59 = scalar_select %p56, %s57, %s58
    %p62 = pneg %p56
    %p63 = scmp.eq.s32.totalorder %s7, 1
    %p64 = por %p62, %p63
    %p65 = scmp.ne.s32.totalorder %s57, %s60
    %p66 = scmp.eq.s32.totalorder %s7, 0
    %p67 = por %p65, %p66
    %p68 = scmp.ne.s32.totalorder %s57, %s60
    %p69 = scmp.eq.s32.totalorder %s12, 1
    %p70 = por %p68, %p69
    %p71 = scmp.ne.s32.totalorder %s60, %s61
    %p72 = scmp.eq.s32.totalorder %s12, 0
    %p73 = por %p71, %p72
    %p74 = scmp.ne.s32.totalorder %s60, %s61
    %p75 = scmp.eq.s32.totalorder %s13, 1
    %p76 = por %p74, %p75
    %p78 = scmp.ne.s32.totalorder %s61, %s77
    %p79 = scmp.eq.s32.totalorder %s13, 0
    %p80 = por %p78, %p79
    %p81 = scmp.le.s32.totalorder 1, %s7
    %p82 = scmp.lt.s32.totalorder %s7, 3
    %p83 = pnand %p81, %p82
    %p84 = pneg %p83
    // Predicated region
    $region9: #{discriminative_binary_mask.2} parent=5 // pred_check
      _
    $region10: #{discriminative_binary_mask.2} parent=5 // pred_check_branch
      %86 = sbr.rel (%p83) target = $region12
    $region11: #{discriminative_binary_mask.2} parent=5 // pred_region
      %s87 = ssub.s32 %s7, 1
    $region12: #{discriminative_binary_mask.2} parent=5 // pred_fallthru
      _
    %p88 = scmp.lt.s32.totalorder %s7, 2
    // Predicated region
    $region13: #{discriminative_binary_mask.2} parent=5 // pred_check
      %p89 = pneg %p88
    $region14: #{discriminative_binary_mask.2} parent=5 // pred_check_branch
      %91 = sbr.rel (%p89) target = $region16
    $region15: #{discriminative_binary_mask.2} parent=5 // pred_region
      // Predicated region
      $region17: #{discriminative_binary_mask.2} parent=15 // pred_check
        %p92 = pneg %p41
      $region18: #{discriminative_binary_mask.2} parent=15 // pred_check_branch
        %94 = sbr.rel (%p92) target = $region20
      $region19: #{discriminative_binary_mask.2} parent=15 // pred_region
        %s95 = smul.u32 2, %s15
        %p96 = scmp.lt.s32.totalorder %s14, 1
        %s97 = scalar_select %p96, %s14, 1
        %p98 = scmp.lt.s32.totalorder %s95, 1
        %s99 = scalar_select %p98, %s95, 1
        %s100 = smul.addr %s97, 2
        %s101 = sadd.s32 %s99, %s100
        %s102 = scalar_lea.vmem %s0, %s101
        %s103 = smul.u32 2, %s15
      $region20: #{discriminative_binary_mask.2} parent=15 // pred_fallthru
        _
    $region16: #{discriminative_binary_mask.2} parent=5 // pred_fallthru
      _
    %p104 = scmp.le.s32.totalorder 1, %s7
    %p105 = scmp.lt.s32.totalorder %s7, 3
    %p106 = pnand %p104, %p105
    %p107 = pneg %p106
    // Predicated region
    $region21: #{discriminative_binary_mask.2} parent=5 // pred_check
      _
    $region22: #{discriminative_binary_mask.2} parent=5 // pred_check_branch
      %109 = sbr.rel (%p106) target = $region24
    $region23: #{discriminative_binary_mask.2} parent=5 // pred_region
      %s110 = ssub.s32 %s7, 1
      %s111 = smul.u32 2, %s17
      %p112 = scmp.lt.s32.totalorder %s16, 1
      %s113 = scalar_select %p112, %s16, 1
      %p114 = scmp.lt.s32.totalorder %s111, 1
      %s115 = scalar_select %p114, %s111, 1
      %s116 = smul.addr %s113, 2
      %s117 = sadd.s32 %s115, %s116
      %s118 = scalar_lea.vmem %s0, %s117
      %p119 = pneg %p47
      %p120 = pneg %p44
      %p121 = pneg %p73
      %p122 = pneg %p70
      %p123 = scmp.lt.s32.totalorder %s16, 1
      %s124 = scalar_select %p123, %s16, 1
      %s125 = smul.addr %s124, 8
      %s126 = scalar_lea.vmem %s1, %s125
      %s127 = smul.u32 2, %s17
      %p128 = scmp.lt.s32.totalorder %s16, 1
      %s129 = scalar_select %p128, %s16, 1
      %p130 = scmp.lt.s32.totalorder %s127, 1
      %s131 = scalar_select %p130, %s127, 1
      %s132 = smul.addr %s129, 2
      %s133 = sadd.s32 %s131, %s132
      %s134 = scalar_lea.vmem %s0, %s133
      %s135 = smul.u32 2, %s17
      %p136 = scmp.lt.s32.totalorder %s16, 1
      %s137 = scalar_select %p136, %s16, 1
      %s138 = smul.addr %s137, 8
      %s139 = scalar_lea.vmem %s1, %s138
      %p140 = scmp.eq.s32.totalorder %s17, 0
      // Predicated region
      $region25: #{discriminative_binary_mask.2} parent=23 // pred_check
        %p141 = pneg %p140
      $region26: #{discriminative_binary_mask.2} parent=23 // pred_check_branch
        %143 = sbr.rel (%p141) target = $region28
      $region27: #{discriminative_binary_mask.2} parent=23 // pred_region
        %vm144 = vcmask 7168
        %145 = vst.msk [vmem:[%s139] sm:$0xff] %vm144, 0
      $region28: #{discriminative_binary_mask.2} parent=23 // pred_fallthru
        _
      %v146 = vld [vmem:[%s134] sm:$0x3]
      %v147 = vlaneseq
      %v148 = vshrl.u32 %v147, 7
      %v149 = vlaneseq
      %v150 = vshrl.u32 %v149, 7
      %v151 = vsub.s32 0, %v150
      %v152 = vrot.slane %v146, %v151
      %v153 = vlaneseq
      %v154 = vshrl.u32 %v153, 7
      %v155 = vsub.s32 1, %v154
      %v156 = vrot.slane %v146, %v155
      %vm157 = vcmp.eq.s32.totalorder %v152, %v148
      %vm158 = vcmp.eq.s32.totalorder %v156, %v148
      %v159 = vsel %vm157, 1, 0
      %v160 = vsel %vm158, 1, 0
      %vm161 = vcmp.gt.s32.totalorder %v159, %v160
      %v162 = vsel %vm161, %v159, %v160
      %v163 = vand.u32 %v162, 65535
      %v164 = vshra.s32 %v162, 16
      %v165 = vcvt.s32.f32 %v163
      %v166 = vcvt.s32.f32 %v164
      %167 = vmax.xlane.f32.xlu0 %v166
      %v168 = vpop.xlane.xlu0 %167
      %vm169 = vcmp.eq.f32.partialorder %v166, %v168
      %v170 = vsel %vm169, %v165, -inf
      %171 = vmax.xlane.f32.xlu0 %v170
      %v172 = vpop.xlane.xlu0 %171
      %v173 = vcvt.f32.s32 %v172
      %v174 = vcvt.f32.s32 %v168
      %v175 = vshll.u32 %v174, 16
      %v176 = vadd.s32 %v175, %v173
      %v177 = vld [vmem:[%s139] sm:$0xff]
      %vm178 = vcmp.gt.s32.totalorder %v177, %v176
      %v179 = vsel %vm178, %v177, %v176
      %vm180 = vcmask 7168
      %181 = vst.msk [vmem:[%s139] sm:$0xff] %vm180, %v179
      %p182 = scmp.lt.s32.totalorder %s16, 1
      %s183 = scalar_select %p182, %s16, 1
      %s184 = smul.addr %s183, 8
      %s185 = scalar_lea.vmem %s1, %s184
      // Predicated region
      $region29: #{discriminative_binary_mask.2} parent=23 // pred_check
        %p186 = pneg %p70
      $region30: #{discriminative_binary_mask.2} parent=23 // pred_check_branch
        %188 = sbr.rel (%p186) target = $region32
      $region31: #{discriminative_binary_mask.2} parent=23 // pred_region
        _
      $region32: #{discriminative_binary_mask.2} parent=23 // pred_fallthru
        _
    $region24: #{discriminative_binary_mask.2} parent=5 // pred_fallthru
      _
    %p189 = scmp.le.s32.totalorder 2, %s7
    // Predicated region
    $region33: #{discriminative_binary_mask.2} parent=5 // pred_check
      %p190 = pneg %p189
    $region34: #{discriminative_binary_mask.2} parent=5 // pred_check_branch
      %192 = sbr.rel (%p190) target = $region36
    $region35: #{discriminative_binary_mask.2} parent=5 // pred_region
      %s193 = ssub.s32 %s7, 2
      // Predicated region
      $region37: #{discriminative_binary_mask.2} parent=35 // pred_check
        %p194 = pneg %p76
      $region38: #{discriminative_binary_mask.2} parent=35 // pred_check_branch
        %196 = sbr.rel (%p194) target = $region40
      $region39: #{discriminative_binary_mask.2} parent=35 // pred_region
        %p197 = scmp.lt.s32.totalorder %s18, 1
        %s198 = scalar_select %p197, %s18, 1
        %s199 = smul.addr %s198, 8
        %s200 = scalar_lea.vmem %s1, %s199
      $region40: #{discriminative_binary_mask.2} parent=35 // pred_fallthru
        _
    $region36: #{discriminative_binary_mask.2} parent=5 // pred_fallthru
      _
  $region6: #{discriminative_binary_mask.2} parent=0 // loop_footer
    %s11 = sadd.s32 1, %s7
  $region7: #{discriminative_binary_mask.2} parent=0 // loop_footer_branch
    %6 = sbr.rel target = $region3
  $region8: #{discriminative_binary_mask.2} parent=0 // loop_exit
    _

// kernel: discriminative_binary_mask.3
$region0: #{discriminative_binary_mask.3}
  #allocation0 [shape = 'u32[]', space=smem, size = 0x4, offset = 0x4, fixed_abs, tag = 'smem constant byte address 0x4 - core index']
  #allocation1 [shape = 'u32[144,128]{1,0:T(1,128)}', space=vmem, size = 0x12000, scoped, tag = 'internal scratch']
  %s0 = inlined_call_operand.vmem [shape: s32[2,25,1], index: 0, kind: input, shape index: {}]
  %s1 = inlined_call_operand.vmem [shape: s32[2,1,256], index: 1, kind: input, shape index: {}]
  %s2 = inlined_call_operand.vmem [shape: s8[2,25,256], index: 2, kind: output, shape index: {0}]
  %s3 = inlined_call_operand.vmem [shape: s8[2,2,256], index: 3, kind: output, shape index: {1}]
  %4 = xla_tuple %s2, %s3
  %s5 = sld [smem:[#allocation0]]
  $region49: #{discriminative_binary_mask.3} parent=0
    _
  %s7 = ssub.s32 1, %s5
  %s8 = scalar_select 0, %s7, %s5
  loop: start=0, step=1, limit=4
  $region2: #{discriminative_binary_mask.3} parent=0 // loop_pre_header
    _
  $region3: #{discriminative_binary_mask.3} parent=0 // loop_header
    %s10 = sphi 0, %s14
    %p11 = scmp.ge.s32.totalorder %s10, 4
    %s17 = sphi 0, %s29
    %s18 = sphi 0, %s25
    %s19 = sphi 0, %s17
    %s20 = sphi 0, %s18
    %s21 = sphi 0, %s19
    %s22 = sphi 0, %s20
    %s32 = sphi 0, %s34
    %s35 = sphi 0, %s32
    %s36 = sphi 0, %s35
    %s52 = sphi 0, %s36
    %s60 = sphi 0, %s62
    %s63 = sphi 0, %s60
    %s64 = sphi 0, %s63
    %s80 = sphi 0, %s64
    %s88 = sphi 0, %s90
    %s91 = sphi 0, %s88
    %s92 = sphi 0, %s91
    %s108 = sphi 0, %s92
    %s116 = sphi 0, %s118
    %s119 = sphi 0, %s116
    %s120 = sphi 0, %s119
    %s136 = sphi 0, %s120
  $region4: #{discriminative_binary_mask.3} parent=0 // loop_header_branch
    %13 = sbr.rel (%p11) target = $region8
  $region5: #{discriminative_binary_mask.3} parent=0 // loop_body
    %s15 = ssub.s32 %s10, 1
    %s16 = ssub.s32 %s10, 2
    %s23 = sadd.s32 1, %s18
    %p24 = scmp.ge.s32.totalorder %s23, 1
    %s25 = scalar_select %p24, 0, %s23
    %s26 = sadd.s32 1, %s17
    %s27 = scalar_select %p24, %s26, %s17
    %p28 = scmp.ge.s32.totalorder %s27, 2
    %s29 = scalar_select %p28, 0, %s27
    %s30 = ssub.s32 %s17, %s29
    %p31 = scmp.eq.s32.totalorder %s30, 0
    %s33 = sadd.s32 %s32, 1
    %s34 = scalar_select %p31, %s32, %s33
    %p37 = pneg %p31
    %p38 = scmp.eq.s32.totalorder %s10, 1
    %p39 = por %p37, %p38
    %p40 = scmp.ne.s32.totalorder %s32, %s35
    %p41 = scmp.eq.s32.totalorder %s10, 0
    %p42 = por %p40, %p41
    %p43 = scmp.ne.s32.totalorder %s32, %s35
    %p44 = scmp.eq.s32.totalorder %s15, 1
    %p45 = por %p43, %p44
    %p46 = scmp.ne.s32.totalorder %s35, %s36
    %p47 = scmp.eq.s32.totalorder %s15, 0
    %p48 = por %p46, %p47
    %p49 = scmp.ne.s32.totalorder %s35, %s36
    %p50 = scmp.eq.s32.totalorder %s16, 1
    %p51 = por %p49, %p50
    %p53 = scmp.ne.s32.totalorder %s36, %s52
    %p54 = scmp.eq.s32.totalorder %s16, 0
    %p55 = por %p53, %p54
    %s56 = ssub.s32 %s17, %s29
    %s57 = ssub.s32 %s18, %s25
    %s58 = sor.u32 %s56, %s57
    %p59 = scmp.eq.s32.totalorder %s58, 0
    %s61 = sadd.s32 %s60, 1
    %s62 = scalar_select %p59, %s60, %s61
    %p65 = pneg %p59
    %p66 = scmp.eq.s32.totalorder %s10, 1
    %p67 = por %p65, %p66
    %p68 = scmp.ne.s32.totalorder %s60, %s63
    %p69 = scmp.eq.s32.totalorder %s10, 0
    %p70 = por %p68, %p69
    %p71 = scmp.ne.s32.totalorder %s60, %s63
    %p72 = scmp.eq.s32.totalorder %s15, 1
    %p73 = por %p71, %p72
    %p74 = scmp.ne.s32.totalorder %s63, %s64
    %p75 = scmp.eq.s32.totalorder %s15, 0
    %p76 = por %p74, %p75
    %p77 = scmp.ne.s32.totalorder %s63, %s64
    %p78 = scmp.eq.s32.totalorder %s16, 1
    %p79 = por %p77, %p78
    %p81 = scmp.ne.s32.totalorder %s64, %s80
    %p82 = scmp.eq.s32.totalorder %s16, 0
    %p83 = por %p81, %p82
    %s84 = ssub.s32 %s17, %s29
    %s85 = ssub.s32 %s18, %s25
    %s86 = sor.u32 %s84, %s85
    %p87 = scmp.eq.s32.totalorder %s86, 0
    %s89 = sadd.s32 %s88, 1
    %s90 = scalar_select %p87, %s88, %s89
    %p93 = pneg %p87
    %p94 = scmp.eq.s32.totalorder %s10, 1
    %p95 = por %p93, %p94
    %p96 = scmp.ne.s32.totalorder %s88, %s91
    %p97 = scmp.eq.s32.totalorder %s10, 0
    %p98 = por %p96, %p97
    %p99 = scmp.ne.s32.totalorder %s88, %s91
    %p100 = scmp.eq.s32.totalorder %s15, 1
    %p101 = por %p99, %p100
    %p102 = scmp.ne.s32.totalorder %s91, %s92
    %p103 = scmp.eq.s32.totalorder %s15, 0
    %p104 = por %p102, %p103
    %p105 = scmp.ne.s32.totalorder %s91, %s92
    %p106 = scmp.eq.s32.totalorder %s16, 1
    %p107 = por %p105, %p106
    %p109 = scmp.ne.s32.totalorder %s92, %s108
    %p110 = scmp.eq.s32.totalorder %s16, 0
    %p111 = por %p109, %p110
    %s112 = ssub.s32 %s17, %s29
    %s113 = ssub.s32 %s18, %s25
    %s114 = sor.u32 %s112, %s113
    %p115 = scmp.eq.s32.totalorder %s114, 0
    %s117 = sadd.s32 %s116, 1
    %s118 = scalar_select %p115, %s116, %s117
    %p121 = pneg %p115
    %p122 = scmp.eq.s32.totalorder %s10, 1
    %p123 = por %p121, %p122
    %p124 = scmp.ne.s32.totalorder %s116, %s119
    %p125 = scmp.eq.s32.totalorder %s10, 0
    %p126 = por %p124, %p125
    %p127 = scmp.ne.s32.totalorder %s116, %s119
    %p128 = scmp.eq.s32.totalorder %s15, 1
    %p129 = por %p127, %p128
    %p130 = scmp.ne.s32.totalorder %s119, %s120
    %p131 = scmp.eq.s32.totalorder %s15, 0
    %p132 = por %p130, %p131
    %p133 = scmp.ne.s32.totalorder %s119, %s120
    %p134 = scmp.eq.s32.totalorder %s16, 1
    %p135 = por %p133, %p134
    %p137 = scmp.ne.s32.totalorder %s120, %s136
    %p138 = scmp.eq.s32.totalorder %s16, 0
    %p139 = por %p137, %p138
    %p140 = scmp.le.s32.totalorder 1, %s10
    %p141 = scmp.lt.s32.totalorder %s10, 3
    %p142 = pnand %p140, %p141
    %p143 = pneg %p142
    // Predicated region
    $region9: #{discriminative_binary_mask.3} parent=5 // pred_check
      _
    $region10: #{discriminative_binary_mask.3} parent=5 // pred_check_branch
      %145 = sbr.rel (%p142) target = $region12
    $region11: #{discriminative_binary_mask.3} parent=5 // pred_region
      %s146 = ssub.s32 %s10, 1
    $region12: #{discriminative_binary_mask.3} parent=5 // pred_fallthru
      _
    %p147 = scmp.lt.s32.totalorder %s10, 2
    // Predicated region
    $region13: #{discriminative_binary_mask.3} parent=5 // pred_check
      %p148 = pneg %p147
    $region14: #{discriminative_binary_mask.3} parent=5 // pred_check_branch
      %150 = sbr.rel (%p148) target = $region16
    $region15: #{discriminative_binary_mask.3} parent=5 // pred_region
      // Predicated region
      $region17: #{discriminative_binary_mask.3} parent=15 // pred_check
        %p151 = pneg %p42
      $region18: #{discriminative_binary_mask.3} parent=15 // pred_check_branch
        %153 = sbr.rel (%p151) target = $region20
      $region19: #{discriminative_binary_mask.3} parent=15 // pred_region
        %p154 = scmp.lt.s32.totalorder %s17, 1
        %s155 = scalar_select %p154, %s17, 1
        %s156 = smul.addr %s155, 4
        %s157 = smul.addr %s156, 8
        %s158 = scalar_lea.vmem %s0, %s157
      $region20: #{discriminative_binary_mask.3} parent=15 // pred_fallthru
        _
      // Predicated region
      $region21: #{discriminative_binary_mask.3} parent=15 // pred_check
        %p159 = pneg %p70
      $region22: #{discriminative_binary_mask.3} parent=15 // pred_check_branch
        %161 = sbr.rel (%p159) target = $region24
      $region23: #{discriminative_binary_mask.3} parent=15 // pred_region
        %s162 = smul.u32 2, %s18
        %p163 = scmp.lt.s32.totalorder %s17, 1
        %s164 = scalar_select %p163, %s17, 1
        %p165 = scmp.lt.s32.totalorder %s162, 1
        %s166 = scalar_select %p165, %s162, 1
        %s167 = smul.addr %s164, 2
        %s168 = sadd.s32 %s166, %s167
        %s169 = scalar_lea.vmem %s1, %s168
        %s170 = smul.u32 2, %s18
      $region24: #{discriminative_binary_mask.3} parent=15 // pred_fallthru
        _
    $region16: #{discriminative_binary_mask.3} parent=5 // pred_fallthru
      _
    %p171 = scmp.le.s32.totalorder 1, %s10
    %p172 = scmp.lt.s32.totalorder %s10, 3
    %p173 = pnand %p171, %p172
    %p174 = pneg %p173
    // Predicated region
    $region25: #{discriminative_binary_mask.3} parent=5 // pred_check
      _
    $region26: #{discriminative_binary_mask.3} parent=5 // pred_check_branch
      %176 = sbr.rel (%p173) target = $region28
    $region27: #{discriminative_binary_mask.3} parent=5 // pred_region
      %s177 = ssub.s32 %s10, 1
      %p178 = scmp.lt.s32.totalorder %s19, 1
      %s179 = scalar_select %p178, %s19, 1
      %s180 = smul.addr %s179, 4
      %s181 = smul.addr %s180, 8
      %s182 = scalar_lea.vmem %s0, %s181
      %p183 = pneg %p48
      %p184 = pneg %p45
      %s185 = smul.u32 2, %s20
      %p186 = scmp.lt.s32.totalorder %s19, 1
      %s187 = scalar_select %p186, %s19, 1
      %p188 = scmp.lt.s32.totalorder %s185, 1
      %s189 = scalar_select %p188, %s185, 1
      %s190 = smul.addr %s187, 2
      %s191 = sadd.s32 %s189, %s190
      %s192 = scalar_lea.vmem %s1, %s191
      %p193 = pneg %p76
      %p194 = pneg %p73
      %p195 = pneg %p104
      %p196 = pneg %p101
      %s197 = smul.u32 2, %s20
      %p198 = scmp.lt.s32.totalorder %s19, 1
      %s199 = scalar_select %p198, %s19, 1
      %p200 = scmp.lt.s32.totalorder %s197, 1
      %s201 = scalar_select %p200, %s197, 1
      %s202 = smul.addr %s199, 8
      %s203 = sadd.s32 %s201, %s202
      %s204 = smul.addr %s203, 2
      %s205 = scalar_lea.vmem %s2, %s204
      %p206 = pneg %p132
      %p207 = pneg %p129
      %s208 = smul.u32 2, %s20
      %p209 = scmp.lt.s32.totalorder %s19, 1
      %s210 = scalar_select %p209, %s19, 1
      %p211 = scmp.lt.s32.totalorder %s208, 1
      %s212 = scalar_select %p211, %s208, 1
      %s213 = smul.addr %s210, 2
      %s214 = sadd.s32 %s212, %s213
      %s215 = scalar_lea.vmem %s3, %s214
      %p216 = scmp.lt.s32.totalorder %s19, 1
      %s217 = scalar_select %p216, %s19, 1
      %s218 = smul.addr %s217, 4
      %s219 = smul.addr %s218, 8
      %s220 = scalar_lea.vmem %s0, %s219
      %s221 = smul.u32 2, %s20
      %p222 = scmp.lt.s32.totalorder %s19, 1
      %s223 = scalar_select %p222, %s19, 1
      %p224 = scmp.lt.s32.totalorder %s221, 1
      %s225 = scalar_select %p224, %s221, 1
      %s226 = smul.addr %s223, 2
      %s227 = sadd.s32 %s225, %s226
      %s228 = scalar_lea.vmem %s1, %s227
      %s229 = smul.u32 2, %s20
      %s230 = smul.u32 2, %s20
      %p231 = scmp.lt.s32.totalorder %s19, 1
      %s232 = scalar_select %p231, %s19, 1
      %p233 = scmp.lt.s32.totalorder %s230, 1
      %s234 = scalar_select %p233, %s230, 1
      %s235 = smul.addr %s232, 8
      %s236 = sadd.s32 %s234, %s235
      %s237 = smul.addr %s236, 2
      %s238 = scalar_lea.vmem %s2, %s237
      %s239 = smul.u32 2, %s20
      %s240 = smul.u32 2, %s20
      %p241 = scmp.lt.s32.totalorder %s19, 1
      %s242 = scalar_select %p241, %s19, 1
      %p243 = scmp.lt.s32.totalorder %s240, 1
      %s244 = scalar_select %p243, %s240, 1
      %s245 = smul.addr %s242, 2
      %s246 = sadd.s32 %s244, %s245
      %s247 = scalar_lea.vmem %s3, %s246
      %s248 = smul.u32 2, %s20
      %v251 = vld [vmem:[%s228] sm:$0x3]
      %v252 = vld [vmem:[%s220] sm:$0xff]
      %v253 = vld [vmem:[%s220 + $0x8] sm:$0xff]
      %v254 = vld [vmem:[%s220 + $0x10] sm:$0xff]
      %v255 = vld [vmem:[%s220 + $0x18] sm:$0x1]
      %256 = vset.pattern.permute.xlu0 0
      %257 = vperm.xlu0 %256, %v252
      %v258 = vpop.permute.xlu0 %257
      %259 = vset.pattern.permute.xlu0 0
      %260 = vperm.xlu0 %259, %v253
      %v261 = vpop.permute.xlu0 %260
      %262 = vset.pattern.permute.xlu0 0
      %263 = vperm.xlu0 %262, %v254
      %v264 = vpop.permute.xlu0 %263
      %265 = vset.pattern.permute.xlu0 0
      %266 = vperm.xlu0 %265, %v255
      %v267 = vpop.permute.xlu0 %266
      %v268 = vlaneseq
      %v269 = vshrl.u32 %v268, 7
      %v270 = vsub.s32 0, %v269
      %v271 = vrot.slane %v251, %v270
      %v272 = vlaneseq
      %v273 = vshrl.u32 %v272, 7
      %v274 = vsub.s32 1, %v273
      %v275 = vrot.slane %v251, %v274
      %vm276 = vcmp.eq.s32.totalorder %v258, %v271
      %vm277 = vcmp.eq.s32.totalorder %v258, %v275
      %vm278 = vcmp.eq.s32.totalorder %v261, %v271
      %vm279 = vcmp.eq.s32.totalorder %v261, %v275
      %vm280 = vcmp.eq.s32.totalorder %v264, %v271
      %vm281 = vcmp.eq.s32.totalorder %v264, %v275
      %vm282 = vcmp.eq.s32.totalorder %v267, %v271
      %vm283 = vcmp.eq.s32.totalorder %v267, %v275
      %vm284 = vmpackc.low %vm278, %vm276
      %vm285 = vmpackc.low %vm282, %vm280
      %vm286 = vmpackc.even %vm285, %vm284
      %vm287 = vmpackc.low %vm279, %vm277
      %vm288 = vmpackc.low %vm283, %vm281
      %vm289 = vmpackc.even %vm288, %vm287
      %v290 = vsel %vm286, 16843009, 0
      %v291 = vsel %vm289, 16843009, 0
      %v292 = vunpack.c.0.s8 %v290
      %v293 = vunpack.c.0.s8 %v291
      %v294 = vunpack.c.1.s8 %v290
      %v295 = vunpack.c.1.s8 %v291
      %v296 = vunpack.c.2.s8 %v290
      %v297 = vunpack.c.2.s8 %v291
      %v298 = vunpack.c.3.s8 %v290
      %v299 = vunpack.c.3.s8 %v291
      %v300 = vpack.c.b16 %v293, %v292
      %v301 = vpack.c.b8 %v300, %v300
      %v302 = vpack.c.b16 %v295, %v294
      %v303 = vpack.c.b8 %v302, %v302
      %v304 = vpack.c.b16 %v297, %v296
      %v305 = vpack.c.b8 %v304, %v304
      %v306 = vpack.c.b16 %v299, %v298
      %v307 = vpack.c.b8 %v306, %v306
      %308 = vst [vmem:[%s238] sm:$0xf] %v301
      %309 = vst [vmem:[%s238 + $0x4] sm:$0xf] %v303
      %310 = vst [vmem:[%s238 + $0x8] sm:$0xf] %v305
      %vm311 = vcmask 1040384
      %vm312 = vsmask.f32 0
      %vm313 = vmand %vm311, %vm312
      %vm314 = vcmask 1042434
      %vm315 = vsmask.f32 2048
      %vm316 = vmand %vm314, %vm315
      %vm317 = vmor %vm316, %vm313
      %v318 = vld [vmem:[%s238 + $0xc] sm:$0x5]
      %v319 = vsel %vm317, %v307, %v318
      %320 = vst [vmem:[%s238 + $0xc] sm:$0x5] %v319
      %vm321 = vcmp.ne.s32.totalorder %v251, 0
      %v322 = vsel %vm321, 1, 0
      %v323 = vlaneseq
      %v324 = vshrl.u32 %v323, 7
      %v325 = vlaneseq
      %v326 = vshrl.u32 %v325, 7
      %v327 = vsub.s32 0, %v326
      %v328 = vrot.slane %v322, %v327
      %v329 = vlaneseq
      %v330 = vshrl.u32 %v329, 7
      %v331 = vsub.s32 1, %v330
      %v332 = vrot.slane %v322, %v331
      %vm333 = vcmp.eq.s32.totalorder %v324, %v328
      %vm334 = vcmp.eq.s32.totalorder %v324, %v332
      %vm335 = vmpackc.low %vm333, %vm333
      %vm336 = vmpackc.even %vm335, %vm335
      %vm337 = vmpackc.low %vm334, %vm334
      %vm338 = vmpackc.even %vm337, %vm337
      %v339 = vsel %vm336, 16843009, 0
      %v340 = vsel %vm338, 16843009, 0
      %v341 = vcombine.low %v339, %v340
      %v343 = vunpack.c.l.s4 1966171168
      %v344 = vunpack.c.0.s8 %v343
      %v345 = vlaneseq
      %v346 = vshrl.u32 %v345, 7
      %v347 = vsub.s32 %v344, %v346
      %v348 = vrot.slane %v341, %v347
      %v350 = vunpack.c.l.s4 1966171168
      %v351 = vunpack.c.0.s8 %v350
      %v352 = vlaneseq
      %v353 = vshrl.u32 %v352, 7
      %v354 = vsub.s32 %v351, %v353
      %v355 = vrot.slane %v348, %v354
      %vm356 = vsmask.f32 256
      %vm357 = vmand %vm311, %vm356
      %vm358 = vcmask 1041409
      %vm359 = vsmask.f32 1280
      %vm360 = vmand %vm358, %vm359
      %vm361 = vmor %vm360, %vm357
      %v362 = vld [vmem:[%s247] sm:$0x3]
      %v363 = vsel %vm361, %v355, %v362
      %364 = vst [vmem:[%s247] sm:$0x3] %v363
      %s365 = smul.u32 2, %s20
      %p366 = scmp.lt.s32.totalorder %s19, 1
      %s367 = scalar_select %p366, %s19, 1
      %p368 = scmp.lt.s32.totalorder %s365, 1
      %s369 = scalar_select %p368, %s365, 1
      %s370 = smul.addr %s367, 8
      %s371 = sadd.s32 %s369, %s370
      %s372 = smul.addr %s371, 2
      %s373 = scalar_lea.vmem %s2, %s372
      %s374 = smul.u32 2, %s20
      %p375 = scmp.lt.s32.totalorder %s19, 1
      %s376 = scalar_select %p375, %s19, 1
      %p377 = scmp.lt.s32.totalorder %s374, 1
      %s378 = scalar_select %p377, %s374, 1
      %s379 = smul.addr %s376, 2
      %s380 = sadd.s32 %s378, %s379
      %s381 = scalar_lea.vmem %s3, %s380
      // Predicated region
      $region29: #{discriminative_binary_mask.3} parent=27 // pred_check
        %p382 = pneg %p101
      $region30: #{discriminative_binary_mask.3} parent=27 // pred_check_branch
        %384 = sbr.rel (%p382) target = $region32
      $region31: #{discriminative_binary_mask.3} parent=27 // pred_region
        %s385 = smul.u32 2, %s20
      $region32: #{discriminative_binary_mask.3} parent=27 // pred_fallthru
        _
      // Predicated region
      $region33: #{discriminative_binary_mask.3} parent=27 // pred_check
        %p386 = pneg %p129
      $region34: #{discriminative_binary_mask.3} parent=27 // pred_check_branch
        %388 = sbr.rel (%p386) target = $region36
      $region35: #{discriminative_binary_mask.3} parent=27 // pred_region
        %s389 = smul.u32 2, %s20
      $region36: #{discriminative_binary_mask.3} parent=27 // pred_fallthru
        _
    $region28: #{discriminative_binary_mask.3} parent=5 // pred_fallthru
      _
    %p390 = scmp.le.s32.totalorder 2, %s10
    // Predicated region
    $region37: #{discriminative_binary_mask.3} parent=5 // pred_check
      %p391 = pneg %p390
    $region38: #{discriminative_binary_mask.3} parent=5 // pred_check_branch
      %393 = sbr.rel (%p391) target = $region40
    $region39: #{discriminative_binary_mask.3} parent=5 // pred_region
      %s394 = ssub.s32 %s10, 2
      // Predicated region
      $region41: #{discriminative_binary_mask.3} parent=39 // pred_check
        %p395 = pneg %p107
      $region42: #{discriminative_binary_mask.3} parent=39 // pred_check_branch
        %397 = sbr.rel (%p395) target = $region44
      $region43: #{discriminative_binary_mask.3} parent=39 // pred_region
        %s398 = smul.u32 2, %s22
        %p399 = scmp.lt.s32.totalorder %s21, 1
        %s400 = scalar_select %p399, %s21, 1
        %p401 = scmp.lt.s32.totalorder %s398, 1
        %s402 = scalar_select %p401, %s398, 1
        %s403 = smul.addr %s400, 8
        %s404 = sadd.s32 %s402, %s403
        %s405 = smul.addr %s404, 2
        %s406 = scalar_lea.vmem %s2, %s405
      $region44: #{discriminative_binary_mask.3} parent=39 // pred_fallthru
        _
      // Predicated region
      $region45: #{discriminative_binary_mask.3} parent=39 // pred_check
        %p407 = pneg %p135
      $region46: #{discriminative_binary_mask.3} parent=39 // pred_check_branch
        %409 = sbr.rel (%p407) target = $region48
      $region47: #{discriminative_binary_mask.3} parent=39 // pred_region
        %s410 = smul.u32 2, %s22
        %p411 = scmp.lt.s32.totalorder %s21, 1
        %s412 = scalar_select %p411, %s21, 1
        %p413 = scmp.lt.s32.totalorder %s410, 1
        %s414 = scalar_select %p413, %s410, 1
        %s415 = smul.addr %s412, 2
        %s416 = sadd.s32 %s414, %s415
        %s417 = scalar_lea.vmem %s3, %s416
      $region48: #{discriminative_binary_mask.3} parent=39 // pred_fallthru
        _
    $region40: #{discriminative_binary_mask.3} parent=5 // pred_fallthru
      _
  $region6: #{discriminative_binary_mask.3} parent=0 // loop_footer
    %s14 = sadd.s32 1, %s10
  $region7: #{discriminative_binary_mask.3} parent=0 // loop_footer_branch
    %9 = sbr.rel target = $region3
  $region8: #{discriminative_binary_mask.3} parent=0 // loop_exit
    _

</llo_original>
